<compile_context>
chip_gen: v5e
topology: v5e:2x2
jax: 0.10.0
libtpu: 0.0.40
codegen_flags: <defaults>
</compile_context>

<pallas_src>
import jax
import jax.numpy as jnp
from jax.experimental import pallas as pl
from jax.experimental.pallas import tpu as pltpu

EPS = 1e-6


def sublayer_connection_kernel(x_ref, ab_ref, o_ref):
    # x_ref: (TILE_ROWS, F)   ab_ref: (2, F)  [row 0 = gamma, row 1 = beta]
    x = x_ref[...].astype(jnp.float32)
    gamma = ab_ref[0:1, :].astype(jnp.float32)   # (1, F)
    beta = ab_ref[1:2, :].astype(jnp.float32)    # (1, F)

    feat = x.shape[-1]
    mean = jnp.mean(x, axis=-1, keepdims=True)
    d = x - mean
    # torch.Tensor.std defaults to the unbiased estimator (ddof=1)
    var = jnp.sum(d * d, axis=-1, keepdims=True) / max(feat - 1, 1)
    # explicit EUP reciprocal (frees VALU slots); gamma folded into the scale
    inv = pl.reciprocal(jnp.sqrt(var) + EPS, approx=False)       # (T, 1)
    normed = d * (gamma * inv) + beta

    # TODO(synk): `sublayer` is an injected, unspecified module -> identity here;
    #             nn.Dropout is eval-mode identity (train-mode stochastic mask
    #             via pltpu.prng_* not implemented).
    o_ref[...] = (x + normed).astype(o_ref.dtype)


def _choose_tile_rows(rows, feat, dtype_bytes,
                      vmem_budget_bytes=24 * 1024 * 1024, max_tile=1024):
    """Largest sublane-aligned row tile that fits a conservative VMEM budget
    (valid on v5e/v6e/v7x), while keeping >=2 grid steps when possible so the
    parallel grid axis can feed both v7x TensorCores."""
    sub = max(8, 32 // dtype_bytes)          # 8 rows for f32, 16 for bf16
    # in + out blocks, each double-buffered -> ~4 live buffers of tile*feat bytes
    budget_rows = vmem_budget_bytes // (4 * feat * dtype_bytes)
    tile = max(sub, min(max_tile, (budget_rows // sub) * sub))

    rows_pad = -(-rows // sub) * sub
    if rows_pad >= 2 * sub:
        tile = min(tile, max(sub, (rows_pad // 2) // sub * sub))
    else:
        tile = min(tile, rows_pad)
    return tile


def sublayer_connection_forward(x, a_2, b_2, dropout_rate=0.0):
    """Fused `x + dropout(sublayer(norm(x)))` with identity sublayer, eval-mode dropout."""
    del dropout_rate  # eval-mode forward: dropout is identity
    orig_shape = x.shape
    feat = orig_shape[-1]
    x2d = x.reshape(-1, feat)
    rows = x2d.shape[0]
    dtype_bytes = jnp.dtype(x.dtype).itemsize

    tile = _choose_tile_rows(rows, feat, dtype_bytes)
    rows_padded = pl.cdiv(rows, tile) * tile
    if rows_padded != rows:
        x2d = jnp.pad(x2d, ((0, rows_padded - rows), (0, 0)))

    ab = jnp.stack([a_2.reshape(feat), b_2.reshape(feat)], axis=0)  # (2, F)

    out2d = pl.pallas_call(
        sublayer_connection_kernel,
        out_shape=jax.ShapeDtypeStruct((rows_padded, feat), x2d.dtype),
        grid_spec=pltpu.PrefetchScalarGridSpec(
            num_scalar_prefetch=0,
            grid=(rows_padded // tile,),
            in_specs=[
                pl.BlockSpec((tile, feat), lambda i: (i, 0)),
                pl.BlockSpec((2, feat), lambda i: (0, 0)),
            ],
            out_specs=pl.BlockSpec((tile, feat), lambda i: (i, 0)),
        ),
        compiler_params=pltpu.CompilerParams(
            dimension_semantics=("parallel",),
        ),
    )(x2d, ab)

    if rows_padded != rows:
        out2d = out2d[:rows]
    return out2d.reshape(orig_shape)


def _reference(x, a_2, b_2):
    feat = x.shape[-1]
    mean = jnp.mean(x, axis=-1, keepdims=True)
    std = jnp.sqrt(jnp.sum((x - mean) ** 2, axis=-1, keepdims=True) / (feat - 1))
    return x + (a_2 * (x - mean) / (std + EPS) + b_2)


if __name__ == "__main__":
    key = jax.random.PRNGKey(0)
    B, S, F = 2, 8, 128          # batch, seq len, model (feature) dim == `size`
    DROPOUT = 0.1                # module hyperparameter; eval-mode forward

    k1, k2, k3, k4 = jax.random.split(key, 4)
    x = jax.random.normal(k1, (B, S, F), dtype=jnp.float32)
    # LayerNorm parameters (init is ones/zeros; perturb to exercise gamma/beta math)
    a_2 = 1.0 + 0.1 * jax.random.normal(k2, (F,), dtype=jnp.float32)
    b_2 = 0.1 * jax.random.normal(k3, (F,), dtype=jnp.float32)

    out = jax.block_until_ready(
        sublayer_connection_forward(x, a_2, b_2, dropout_rate=DROPOUT))
    assert jnp.allclose(out, _reference(x, a_2, b_2), atol=1e-5, rtol=1e-5)

    # second shape whose row count is not a multiple of the tile -> pad/unpad path
    x2 = jax.random.normal(k4, (3, 5, F), dtype=jnp.float32)
    out2 = jax.block_until_ready(
        sublayer_connection_forward(x2, a_2, b_2, dropout_rate=DROPOUT))
    assert jnp.allclose(out2, _reference(x2, a_2, b_2), atol=1e-5, rtol=1e-5)

    print("KERNEL_OK")
</pallas_src>

<mosaic_0001>
module attributes {stable_mosaic.version = 11 : i64} {
  func.func @sublayer_connection_kernel(%arg0: i32, %arg1: memref<8x128xf32, #tpu.memory_space<vmem>>, %arg2: memref<2x128xf32, #tpu.memory_space<vmem>>, %arg3: memref<8x128xf32, #tpu.memory_space<vmem>>) attributes {dimension_semantics = [#tpu.dimension_semantics<parallel>], iteration_bounds = array<i64: 2>, scalar_prefetch = 0 : i64, scratch_operands = 0 : i64, tpu.core_type = #tpu.core_type<tc>, window_params = [{transform_indices = @transform_0, window_bounds = array<i64: 8, 128>}, {pipeline_mode = #tpu.pipeline_mode<synchronous>, transform_indices = @transform_1, window_bounds = array<i64: 2, 128>}, {transform_indices = @transform_2, window_bounds = array<i64: 8, 128>}]} {
    %c0 = arith.constant 0 : index
    %c0_0 = arith.constant 0 : index
    %0 = vector.load %arg1[%c0, %c0_0] : memref<8x128xf32, #tpu.memory_space<vmem>>, vector<8x128xf32>
    %c0_1 = arith.constant 0 : index
    %c0_2 = arith.constant 0 : index
    %1 = vector.load %arg2[%c0_1, %c0_2] : memref<2x128xf32, #tpu.memory_space<vmem>>, vector<1x128xf32>
    %c1 = arith.constant 1 : index
    %c0_3 = arith.constant 0 : index
    %2 = vector.load %arg2[%c1, %c0_3] : memref<2x128xf32, #tpu.memory_space<vmem>>, vector<1x128xf32>
    %cst = arith.constant dense<0.000000e+00> : vector<8xf32>
    %3 = vector.multi_reduction <add>, %0, %cst [1] : vector<8x128xf32> to vector<8xf32>
    %4 = vector.shape_cast %3 : vector<8xf32> to vector<8x1xf32>
    %cst_4 = arith.constant 1.280000e+02 : f32
    %5 = vector.broadcast %cst_4 : f32 to vector<8x1xf32>
    %6 = arith.divf %4, %5 : vector<8x1xf32>
    %7 = vector.broadcast %6 : vector<8x1xf32> to vector<8x128xf32>
    %8 = arith.subf %0, %7 : vector<8x128xf32>
    %9 = arith.mulf %8, %8 : vector<8x128xf32>
    %cst_5 = arith.constant dense<0.000000e+00> : vector<8xf32>
    %10 = vector.multi_reduction <add>, %9, %cst_5 [1] : vector<8x128xf32> to vector<8xf32>
    %11 = vector.shape_cast %10 : vector<8xf32> to vector<8x1xf32>
    %cst_6 = arith.constant 1.270000e+02 : f32
    %12 = vector.broadcast %cst_6 : f32 to vector<8x1xf32>
    %13 = arith.divf %11, %12 : vector<8x1xf32>
    %14 = math.sqrt %13 : vector<8x1xf32>
    %cst_7 = arith.constant 9.99999997E-7 : f32
    %15 = vector.broadcast %cst_7 : f32 to vector<8x1xf32>
    %16 = arith.addf %14, %15 : vector<8x1xf32>
    %17 = tpu.reciprocal %16 : vector<8x1xf32> -> vector<8x1xf32>
    %18 = vector.broadcast %1 : vector<1x128xf32> to vector<8x128xf32>
    %19 = vector.broadcast %17 : vector<8x1xf32> to vector<8x128xf32>
    %20 = arith.mulf %18, %19 : vector<8x128xf32>
    %21 = arith.mulf %8, %20 : vector<8x128xf32>
    %22 = vector.broadcast %2 : vector<1x128xf32> to vector<8x128xf32>
    %23 = arith.addf %21, %22 : vector<8x128xf32>
    %24 = arith.addf %0, %23 : vector<8x128xf32>
    %c0_8 = arith.constant 0 : index
    %c0_9 = arith.constant 0 : index
    %25 = vector.load %arg3[%c0_8, %c0_9] : memref<8x128xf32, #tpu.memory_space<vmem>>, vector<8x128xf32>
    tpu.vector_store %arg3[%c0_8, %c0_9], %24 {strides = array<i32>} : memref<8x128xf32, #tpu.memory_space<vmem>>, vector<8x128xf32>,
    return
  }
  func.func @transform_0(%arg0: i32) -> (i32, i32) {
    %c0_i32 = arith.constant 0 : i32
    %c0_i32_0 = arith.constant 0 : i32
    return %arg0, %c0_i32 : i32, i32
  }
  func.func @transform_1(%arg0: i32) -> (i32, i32) {
    %c0_i32 = arith.constant 0 : i32
    %c0_i32_0 = arith.constant 0 : i32
    %c0_i32_1 = arith.constant 0 : i32
    return %c0_i32, %c0_i32_0 : i32, i32
  }
  func.func @transform_2(%arg0: i32) -> (i32, i32) {
    %c0_i32 = arith.constant 0 : i32
    %c0_i32_0 = arith.constant 0 : i32
    return %arg0, %c0_i32 : i32, i32
  }
}

</mosaic_0001>

<llo_original>
// kernel: tpu_custom_call.1
$region0: #{tpu_custom_call.1}
  #allocation0 [shape = 'u32[]', space=smem, size = 0x4, offset = 0x4, fixed_abs, tag = 'smem constant byte address 0x4 - core index']
  #allocation1 [shape = 'u32[72,128]{1,0:T(1,128)}', space=vmem, size = 0x9000, scoped, tag = 'internal scratch']
  %s0 = inlined_call_operand.hbm [shape: f32[16,128], index: 0, kind: input, shape index: {}]
  %s1 = inlined_call_operand.hbm [shape: f32[2,128], index: 1, kind: input, shape index: {}]
  %s2 = inlined_call_operand.hbm [shape: f32[16,128], index: 2, kind: output, shape index: {}]
  %s3 = sld [smem:[#allocation0]]
  $region49: #{tpu_custom_call.1} parent=0
    _
  %s5 = ssub.s32 1, %s3
  %s6 = scalar_select 0, %s5, %s3
  $region1: #{tpu_custom_call.1} parent=0
    #allocation2 [shape = 'u8[8192]{0}', space=vmem, size = 0x2000, scoped, tag = 'input window, operand 0']
    #allocation3 [shape = 's32[2]{0}', space=sflag, size = 0x8, scoped, tag = 'scoped memory for tpu_custom_call.1']
    #allocation4 [shape = 's32[2]{0}', space=sflag, size = 0x8, scoped, tag = 'scoped memory for tpu_custom_call.1']
    #allocation5 [shape = 'u8[1024]{0}', space=vmem, size = 0x400, scoped, tag = 'input window, operand 1, single buffered']
    #allocation6 [shape = 's32[1]{0}', space=sflag, size = 0x4, scoped, tag = 'scoped memory for tpu_custom_call.1']
    #allocation7 [shape = 'u8[8192]{0}', space=vmem, size = 0x2000, scoped, tag = 'output window, operand 0']
    %7 = vsyncpa [#allocation3], 0
    %s8 = scalar_lea.sflag [#allocation3], 1
    %9 = vsyncpa %s8, 0
    %10 = vsyncpa [#allocation6], 0
    %11 = vsyncpa [#allocation4], 0
    %s12 = scalar_lea.sflag [#allocation4], 1
    %13 = vsyncpa %s12, 0
    loop: start=0, step=1, limit=4
    $region2: #{tpu_custom_call.1} parent=1 // loop_pre_header
      _
    $region3: #{tpu_custom_call.1} parent=1 // loop_header
      %s15 = sphi 0, %s19
      %p16 = scmp.ge.s32.totalorder %s15, 4
      %s25 = sphi 0, %s27
      %s28 = sphi 0, %s25
      %s29 = sphi 0, %s28
      %s45 = sphi 0, %s29
      %s49 = sphi 0, %s49
      %s51 = sphi 0, %s49
      %s52 = sphi 0, %s51
      %s66 = sphi 0, %s52
      %s72 = sphi 0, %s74
      %s75 = sphi 0, %s72
      %s76 = sphi 0, %s75
      %s92 = sphi 0, %s76
    $region4: #{tpu_custom_call.1} parent=1 // loop_header_branch
      %18 = sbr.rel (%p16) target = $region8
    $region5: #{tpu_custom_call.1} parent=1 // loop_body
      %s20 = ssub.s32 %s15, 1
      %s21 = ssub.s32 %s15, 2
      %s22 = sadd.s32 %s15, 1
      %s23 = ssub.s32 %s15, %s22
      %p24 = scmp.eq.s32.totalorder %s23, 0
      %s26 = sadd.s32 %s25, 1
      %s27 = scalar_select %p24, %s25, %s26
      %p30 = pneg %p24
      %p31 = scmp.eq.s32.totalorder %s15, 1
      %p32 = por %p30, %p31
      %p33 = scmp.ne.s32.totalorder %s25, %s28
      %p34 = scmp.eq.s32.totalorder %s15, 0
      %p35 = por %p33, %p34
      %p36 = scmp.ne.s32.totalorder %s25, %s28
      %p37 = scmp.eq.s32.totalorder %s20, 1
      %p38 = por %p36, %p37
      %p39 = scmp.ne.s32.totalorder %s28, %s29
      %p40 = scmp.eq.s32.totalorder %s20, 0
      %p41 = por %p39, %p40
      %p42 = scmp.ne.s32.totalorder %s28, %s29
      %p43 = scmp.eq.s32.totalorder %s21, 1
      %p44 = por %p42, %p43
      %p46 = scmp.ne.s32.totalorder %s29, %s45
      %p47 = scmp.eq.s32.totalorder %s21, 0
      %p48 = por %p46, %p47
      %s50 = sadd.s32 %s49, 1
      %p53 = scmp.eq.s32.totalorder %s15, 1
      %p54 = scmp.ne.s32.totalorder %s49, %s51
      %p55 = scmp.eq.s32.totalorder %s15, 0
      %p56 = por %p54, %p55
      %p57 = scmp.ne.s32.totalorder %s49, %s51
      %p58 = scmp.eq.s32.totalorder %s20, 1
      %p59 = por %p57, %p58
      %p60 = scmp.ne.s32.totalorder %s51, %s52
      %p61 = scmp.eq.s32.totalorder %s20, 0
      %p62 = por %p60, %p61
      %p63 = scmp.ne.s32.totalorder %s51, %s52
      %p64 = scmp.eq.s32.totalorder %s21, 1
      %p65 = por %p63, %p64
      %p67 = scmp.ne.s32.totalorder %s52, %s66
      %p68 = scmp.eq.s32.totalorder %s21, 0
      %p69 = por %p67, %p68
      %s70 = ssub.s32 %s15, %s22
      %p71 = scmp.eq.s32.totalorder %s70, 0
      %s73 = sadd.s32 %s72, 1
      %s74 = scalar_select %p71, %s72, %s73
      %p77 = pneg %p71
      %p78 = scmp.eq.s32.totalorder %s15, 1
      %p79 = por %p77, %p78
      %p80 = scmp.ne.s32.totalorder %s72, %s75
      %p81 = scmp.eq.s32.totalorder %s15, 0
      %p82 = por %p80, %p81
      %p83 = scmp.ne.s32.totalorder %s72, %s75
      %p84 = scmp.eq.s32.totalorder %s20, 1
      %p85 = por %p83, %p84
      %p86 = scmp.ne.s32.totalorder %s75, %s76
      %p87 = scmp.eq.s32.totalorder %s20, 0
      %p88 = por %p86, %p87
      %p89 = scmp.ne.s32.totalorder %s75, %s76
      %p90 = scmp.eq.s32.totalorder %s21, 1
      %p91 = por %p89, %p90
      %p93 = scmp.ne.s32.totalorder %s76, %s92
      %p94 = scmp.eq.s32.totalorder %s21, 0
      %p95 = por %p93, %p94
      %p96 = scmp.le.s32.totalorder 1, %s15
      %p97 = scmp.lt.s32.totalorder %s15, 3
      %p98 = pnand %p96, %p97
      %p99 = pneg %p98
      // Predicated region
      $region9: #{tpu_custom_call.1} parent=5 // pred_check
        _
      $region10: #{tpu_custom_call.1} parent=5 // pred_check_branch
        %101 = sbr.rel (%p98) target = $region12
      $region11: #{tpu_custom_call.1} parent=5 // pred_region
        %s102 = ssub.s32 %s15, 1
        // Predicated region
        $region13: #{tpu_custom_call.1} parent=11 // pred_check
          %p103 = pneg %p62
        $region14: #{tpu_custom_call.1} parent=11 // pred_check_branch
          %105 = sbr.rel (%p103) target = $region16
        $region15: #{tpu_custom_call.1} parent=11 // pred_region
          %107 = vsyncadd [#allocation6], 0
          %s109 = sshll.u32 %s1, 4
          %s110 = int_to_ptr.hbm [resolvable:$true] %s109
          %s111 = sshll.u32 [#allocation5], 4
          %s112 = int_to_ptr.vmem [resolvable:$true] %s111
          %114 = dma.hbm_to_vmem [thread:$0]  %s110, 32, %s112, [#allocation6]
        $region16: #{tpu_custom_call.1} parent=11 // pred_fallthru
          _
      $region12: #{tpu_custom_call.1} parent=5 // pred_fallthru
        _
      %p115 = scmp.lt.s32.totalorder %s15, 2
      // Predicated region
      $region17: #{tpu_custom_call.1} parent=5 // pred_check
        %p116 = pneg %p115
      $region18: #{tpu_custom_call.1} parent=5 // pred_check_branch
        %118 = sbr.rel (%p116) target = $region20
      $region19: #{tpu_custom_call.1} parent=5 // pred_region
        // Predicated region
        $region21: #{tpu_custom_call.1} parent=19 // pred_check
          %p119 = pneg %p35
        $region22: #{tpu_custom_call.1} parent=19 // pred_check_branch
          %121 = sbr.rel (%p119) target = $region24
        $region23: #{tpu_custom_call.1} parent=19 // pred_region
          %s122 = sand.u32 %s25, 1
          %s123 = scalar_lea.sflag [#allocation3], %s122
          %s124 = sand.u32 %s25, 1
          %s125 = smul.addr %s124, 8
          %s126 = scalar_lea.vmem [#allocation2], %s125
          %128 = vsyncadd %s123, 0
          %s129 = smul.addr %s15, 8
          %s130 = scalar_lea.hbm %s0, %s129
          %s132 = sshll.u32 %s130, 4
          %s133 = int_to_ptr.hbm [resolvable:$true] %s132
          %s134 = sshll.u32 %s126, 4
          %s135 = int_to_ptr.vmem [resolvable:$true] %s134
          %137 = dma.hbm_to_vmem [thread:$0]  %s133, 128, %s135, %s123
        $region24: #{tpu_custom_call.1} parent=19 // pred_fallthru
          _
      $region20: #{tpu_custom_call.1} parent=5 // pred_fallthru
        _
      %p138 = scmp.le.s32.totalorder 1, %s15
      %p139 = scmp.lt.s32.totalorder %s15, 3
      %p140 = pnand %p138, %p139
      %p141 = pneg %p140
      // Predicated region
      $region25: #{tpu_custom_call.1} parent=5 // pred_check
        _
      $region26: #{tpu_custom_call.1} parent=5 // pred_check_branch
        %143 = sbr.rel (%p140) target = $region28
      $region27: #{tpu_custom_call.1} parent=5 // pred_region
        %s144 = ssub.s32 %s15, 1
        %s145 = sand.u32 %s28, 1
        %s146 = scalar_lea.sflag [#allocation3], %s145
        %s147 = sand.u32 %s28, 1
        %s148 = smul.addr %s147, 8
        %s149 = scalar_lea.vmem [#allocation2], %s148
        // Predicated region
        $region29: #{tpu_custom_call.1} parent=27 // pred_check
          %p150 = pneg %p41
        $region30: #{tpu_custom_call.1} parent=27 // pred_check_branch
          %152 = sbr.rel (%p150) target = $region32
        $region31: #{tpu_custom_call.1} parent=27 // pred_region
          %154 = dma.done %s146, 128
        $region32: #{tpu_custom_call.1} parent=27 // pred_fallthru
          _
        // Predicated region
        $region33: #{tpu_custom_call.1} parent=27 // pred_check
          %p155 = pneg %p62
        $region34: #{tpu_custom_call.1} parent=27 // pred_check_branch
          %157 = sbr.rel (%p155) target = $region36
        $region35: #{tpu_custom_call.1} parent=27 // pred_region
          %159 = dma.done [#allocation6], 32
        $region36: #{tpu_custom_call.1} parent=27 // pred_fallthru
          _
        %s160 = sand.u32 %s28, 1
        %s161 = scalar_lea.sflag [#allocation3], %s160
        %s162 = sand.u32 %s28, 1
        %s163 = smul.addr %s162, 8
        %s164 = scalar_lea.vmem [#allocation2], %s163
        %p165 = pneg %p41
        %p166 = pneg %p38
        %p167 = pneg %p62
        %p168 = pneg %p59
        %p169 = pneg %p88
        %p170 = pneg %p85
        %s171 = sand.u32 %s75, 1
        %s172 = scalar_lea.sflag [#allocation4], %s171
        %s173 = sand.u32 %s75, 1
        %s174 = smul.addr %s173, 8
        %s175 = scalar_lea.vmem [#allocation7], %s174
        %v176 = vld [vmem:[%s149] sm:$0xff]
        %v177 = vld [vmem:[#allocation5] sm:$0x1]
        %v178 = vld [vmem:[#allocation5 + $0x1] sm:$0x1]
        %179 = vadd.xlane.f32.xlu0 %v176
        %v180 = vpop.xlane.xlu0 %179
        %v181 = vrcp.pop 128.0
        %v182 = vmul.f32 128.0, %v181
        %v183 = vsub.f32 1.0, %v182
        %v184 = vmul.f32 %v181, %v183
        %v185 = vadd.f32 %v181, %v184
        %vm186 = vweird.f32 %v181
        %v187 = vsel %vm186, %v181, %v185
        %v188 = vmul.f32 %v180, %v187
        %v189 = vsub.f32 %v176, %v188
        %v190 = vmul.f32 %v189, %v189
        %191 = vadd.xlane.f32.xlu0 %v190
        %v192 = vpop.xlane.xlu0 %191
        %v193 = vrcp.pop 127.0
        %v194 = vmul.f32 127.0, %v193
        %v195 = vsub.f32 1.0, %v194
        %v196 = vmul.f32 %v193, %v195
        %v197 = vadd.f32 %v193, %v196
        %vm198 = vweird.f32 %v193
        %v199 = vsel %vm198, %v193, %v197
        %v200 = vmul.f32 %v192, %v199
        %v201 = vrsqrt.pop %v200
        %v202 = vmul.f32 %v201, %v200
        %v203 = vmul.f32 %v202, %v201
        %v204 = vmul.f32 0.5, %v203
        %v205 = vsub.f32 1.5, %v204
        %v206 = vmul.f32 %v201, %v205
        %v207 = vmul.f32 %v200, %v206
        %vm208 = vcmp.eq.f32.partialorder %v200, inf
        %v209 = vsel %vm208, %v200, %v207
        %vm210 = vcmp.eq.f32.partialorder %v200, 0.0
        %v211 = vand.u32 %v200, 2147483648
        %v212 = vsel %vm210, %v211, %v209
        %v213 = vadd.f32 %v212, 1e-06
        %v214 = vrcp.pop %v213
        %v215 = vmul.f32 %v213, %v214
        %v216 = vsub.f32 1.0, %v215
        %v217 = vmul.f32 %v214, %v216
        %v218 = vadd.f32 %v214, %v217
        %vm219 = vweird.f32 %v213
        %vm220 = vweird.f32 %v214
        %vm221 = vmor %vm219, %vm220
        %v222 = vsel %vm221, %v214, %v218
        %v223 = vand.u32 2147483647, %v213
        %vm224 = vcmp.eq.f32.partialorder %v223, 8.507059e+37
        %v225 = vand.u32 %v213, 2147483648
        %v226 = vor.u32 1.1754944e-38, %v225
        %v227 = vsel %vm224, %v226, %v222
        %v228 = vperm.slane %v177, 0
        %v229 = vmul.f32 %v228, %v227
        %v230 = vmul.f32 %v189, %v229
        %v231 = vperm.slane %v178, 0
        %v232 = vadd.f32 %v230, %v231
        %v233 = vadd.f32 %v176, %v232
        %234 = vst [vmem:[%s175] sm:$0xff] %v233
        %s235 = sand.u32 %s75, 1
        %s236 = scalar_lea.sflag [#allocation4], %s235
        %s237 = sand.u32 %s75, 1
        %s238 = smul.addr %s237, 8
        %s239 = scalar_lea.vmem [#allocation7], %s238
        // Predicated region
        $region37: #{tpu_custom_call.1} parent=27 // pred_check
          %p240 = pneg %p85
        $region38: #{tpu_custom_call.1} parent=27 // pred_check_branch
          %242 = sbr.rel (%p240) target = $region40
        $region39: #{tpu_custom_call.1} parent=27 // pred_region
          %244 = vsyncadd %s236, 0
          %s245 = smul.addr %s20, 8
          %s246 = scalar_lea.hbm %s2, %s245
          %s248 = sshll.u32 %s239, 4
          %s249 = int_to_ptr.vmem [resolvable:$true] %s248
          %s250 = sshll.u32 %s246, 4
          %s251 = int_to_ptr.hbm [resolvable:$true] %s250
          %253 = dma.vmem_to_hbm [thread:$0]  %s249, 128, %s251, %s236
        $region40: #{tpu_custom_call.1} parent=27 // pred_fallthru
          _
      $region28: #{tpu_custom_call.1} parent=5 // pred_fallthru
        _
      %p254 = scmp.le.s32.totalorder 2, %s15
      // Predicated region
      $region41: #{tpu_custom_call.1} parent=5 // pred_check
        %p255 = pneg %p254
      $region42: #{tpu_custom_call.1} parent=5 // pred_check_branch
        %257 = sbr.rel (%p255) target = $region44
      $region43: #{tpu_custom_call.1} parent=5 // pred_region
        %s258 = ssub.s32 %s15, 2
        // Predicated region
        $region45: #{tpu_custom_call.1} parent=43 // pred_check
          %p259 = pneg %p91
        $region46: #{tpu_custom_call.1} parent=43 // pred_check_branch
          %261 = sbr.rel (%p259) target = $region48
        $region47: #{tpu_custom_call.1} parent=43 // pred_region
          %s262 = sand.u32 %s76, 1
          %s263 = scalar_lea.sflag [#allocation4], %s262
          %s264 = sand.u32 %s76, 1
          %s265 = smul.addr %s264, 8
          %s266 = scalar_lea.vmem [#allocation7], %s265
          %268 = dma.done %s263, 128
        $region48: #{tpu_custom_call.1} parent=43 // pred_fallthru
          _
      $region44: #{tpu_custom_call.1} parent=5 // pred_fallthru
        _
    $region6: #{tpu_custom_call.1} parent=1 // loop_footer
      %s19 = sadd.s32 1, %s15
    $region7: #{tpu_custom_call.1} parent=1 // loop_footer_branch
      %14 = sbr.rel target = $region3
    $region8: #{tpu_custom_call.1} parent=1 // loop_exit
      _
    %269 = vsyncpa [#allocation3], 1
    %s270 = scalar_lea.sflag [#allocation3], 1
    %271 = vsyncpa %s270, 1
    %272 = vsyncpa [#allocation6], 1
    %273 = vsyncpa [#allocation4], 1
    %s274 = scalar_lea.sflag [#allocation4], 1
    %275 = vsyncpa %s274, 1

</llo_original>
